<compile_context>
chip_gen: v7x
topology: tpu7x:2x2x1
jax: 0.10.0
libtpu: 0.0.40
codegen_flags: <defaults>
</compile_context>

<pallas_src>
import numpy as np
import jax
import jax.numpy as jnp
from jax.experimental import pallas as pl
from jax.experimental.pallas import tpu as pltpu


# ----------------------------------------------------------------------------
# Parameter init (deterministic, mirrors RotaryPositionalEmbedding._init_weight)
# ----------------------------------------------------------------------------
def make_sinusoidal_weight(n_pos: int, dim: int) -> np.ndarray:
    position_enc = np.array(
        [[pos / np.power(10000, 2 * (j // 2) / dim) for j in range(dim)]
         for pos in range(n_pos)]
    )
    out = np.zeros((n_pos, dim), dtype=np.float32)
    sentinel = dim // 2 if dim % 2 == 0 else dim // 2 + 1
    out[:, 0:sentinel] = np.sin(position_enc[:, 0::2]).astype(np.float32)
    out[:, sentinel:] = np.cos(position_enc[:, 1::2]).astype(np.float32)
    return out


# ----------------------------------------------------------------------------
# Pallas kernels.
#
#   out[2i]   = x[2i]  *cos[2i]   - x[2i+1]*sin[2i]
#   out[2i+1] = x[2i+1]*cos[2i+1] + x[2i]  *sin[2i+1]
#
# With sin_e = sin on even lanes / 0 on odd lanes and sin_o = roll(sin_e, +1)
# (exact because lane parity == feature parity, sin repeats per pair, and the
# wrapped lane is a zeroed odd lane):
#   out = x*cos + roll(x, +1)*sin_o - roll(x, -1)*sin_e
# The rolls live on the XLU (otherwise idle here) and the zeroed lanes make
# the circular wrap at block-row boundaries contribute exactly 0.
# ----------------------------------------------------------------------------
def _rope_math(x, cos, sin_e, sin_o):
    lanes = x.shape[-1]
    ax = x.ndim - 1
    x_prev = pltpu.roll(x, shift=1, axis=ax)          # x_prev[j] = x[j-1]
    x_next = pltpu.roll(x, shift=lanes - 1, axis=ax)  # x_next[j] = x[j+1]
    return x * cos + x_prev * sin_o - x_next * sin_e


def _rope_kernel_pair(x_ref, x2_ref, cos_ref, se_ref, o1_ref, o2_ref):
    cos = cos_ref[...].astype(jnp.float32)
    se = se_ref[...].astype(jnp.float32)
    so = pltpu.roll(se, shift=1, axis=se.ndim - 1)    # derived, not streamed
    o1_ref[...] = _rope_math(x_ref[...].astype(jnp.float32),
                             cos, se, so).astype(o1_ref.dtype)
    o2_ref[...] = _rope_math(x2_ref[...].astype(jnp.float32),
                             cos, se, so).astype(o2_ref.dtype)


def _rope_kernel_single(x_ref, cos_ref, se_ref, o_ref):
    cos = cos_ref[...].astype(jnp.float32)
    se = se_ref[...].astype(jnp.float32)
    so = pltpu.roll(se, shift=1, axis=se.ndim - 1)
    o_ref[...] = _rope_math(x_ref[...].astype(jnp.float32),
                            cos, se, so).astype(o_ref.dtype)


# ----------------------------------------------------------------------------
# Tiling plan
# ----------------------------------------------------------------------------
_LANES = 128


def _row_tile_target() -> int:
    """Generation-aware row-tile target (rows of 128 lanes per block)."""
    try:
        info = pltpu.get_tpu_info()
        vmem = getattr(info, "vmem_capacity_bytes", 64 << 20)
    except Exception:  # pragma: no cover - interpret mode / exotic backends
        vmem = 64 << 20
    # 2048 rows x 128 lanes x f32, pair path, double-buffered ≈ 12 MiB:
    # comfortable even on v7x (64 MiB physical); fall back to 1024 otherwise.
    return 2048 if vmem >= (64 << 20) else 1024


def _plan_rows(flat_len: int, target: int):
    """Return (rs, row_tile, n_tiles): flat stream padded to rs*128 elements,
    rs == n_tiles * row_tile, row_tile a multiple of 8 (or == rs when one tile
    covers everything, where block == full array dims is allowed)."""
    rs_raw = pl.cdiv(flat_len, _LANES)
    if rs_raw <= target:
        return rs_raw, rs_raw, 1
    n_tiles = pl.cdiv(rs_raw, target)
    row_tile = ((pl.cdiv(rs_raw, n_tiles) + 7) // 8) * 8
    return n_tiles * row_tile, row_tile, n_tiles


# ----------------------------------------------------------------------------
# pallas_call wrapper
# ----------------------------------------------------------------------------
def rotary_apply_pallas(xs, cos_t, sin_e_t, *, row_tile, donate_inputs=False):
    """xs: tuple of 1 or 2 arrays shaped [B, RS, 128]; tables shaped [RS, 128]."""
    B, RS, L = xs[0].shape
    n = len(xs)
    n_tiles = RS // row_tile
    grid = (n_tiles, B)  # batch innermost -> table block index constant across B

    # Leading batch dim squeezed (None) so the kernel sees 2-D lane-dense tiles.
    x_spec = pl.BlockSpec((None, row_tile, L), lambda t, b: (b, t, 0))
    tab_spec = pl.BlockSpec((row_tile, L), lambda t, b: (t, 0))

    kernel = _rope_kernel_single if n == 1 else _rope_kernel_pair
    grid_spec = pltpu.PrefetchScalarGridSpec(
        num_scalar_prefetch=0,
        grid=grid,
        in_specs=[x_spec] * n + [tab_spec, tab_spec],
        out_specs=[x_spec] * n,
    )

    x_bytes = row_tile * L * jnp.dtype(xs[0].dtype).itemsize
    t_bytes = row_tile * L * jnp.dtype(cos_t.dtype).itemsize
    footprint = 4 * n * x_bytes + 4 * t_bytes        # double-buffered streams
    vmem_limit = int(min(max(footprint + (8 << 20), 24 << 20), 48 << 20))

    return pl.pallas_call(
        kernel,
        out_shape=tuple(jax.ShapeDtypeStruct(x.shape, x.dtype) for x in xs),
        grid_spec=grid_spec,
        compiler_params=pltpu.CompilerParams(
            dimension_semantics=("parallel", "parallel"),
            vmem_limit_bytes=vmem_limit),
        input_output_aliases=({i: i for i in range(n)} if donate_inputs else {}),
    )(*xs, cos_t, sin_e_t)


# ----------------------------------------------------------------------------
# Table construction (cos + even-lane sin only; sin_odd derived in-kernel)
# ----------------------------------------------------------------------------
def _build_tables(weight, seq_len, dim, past_key_values_length, rs, lanes, dtype):
    sinusoidal_pos = weight[past_key_values_length:past_key_values_length + seq_len]
    sin, cos = jnp.split(sinusoidal_pos, 2, axis=-1)
    sin_pos = jnp.repeat(sin, 2, axis=-1)   # [S, D]
    cos_pos = jnp.repeat(cos, 2, axis=-1)   # [S, D]
    even = (jnp.arange(dim) % 2 == 0)[None, :]
    sin_e = jnp.where(even, sin_pos, 0.0)   # sin on even lanes, 0 on odd

    flat = seq_len * dim
    pad = rs * lanes - flat

    def prep(t):
        t = t.reshape(flat)
        if pad:
            t = jnp.pad(t, (0, pad))        # padded lanes -> 0 (contribute 0)
        return t.reshape(rs, lanes).astype(dtype)

    return prep(cos_pos), prep(sin_e)


# ----------------------------------------------------------------------------
# Module-equivalent forward
# ----------------------------------------------------------------------------
def rotary_forward(x, x2, weight, past_key_values_length: int = 0, *,
                   table_fn=None, row_tile_target=None, donate_inputs=False):
    B, S, D = x.shape
    assert D % 2 == 0, "RotaryPositionalEmbedding requires an even embedding_dim"

    flat = S * D
    target = row_tile_target if row_tile_target is not None else _row_tile_target()
    rs, row_tile, _ = _plan_rows(flat, target)
    pad = rs * _LANES - flat

    if table_fn is not None:
        cos_t, sin_e_t = table_fn(S, past_key_values_length, rs, _LANES, x.dtype)
    else:
        cos_t, sin_e_t = _build_tables(
            weight, S, D, past_key_values_length, rs, _LANES, x.dtype)

    def to_rows(a):
        a = a.reshape(B, flat)
        if pad:
            a = jnp.pad(a, ((0, 0), (0, pad)))
        return a.reshape(B, rs, _LANES)

    def from_rows(a):
        a = a.reshape(B, rs * _LANES)
        if pad:
            a = a[:, :flat]
        return a.reshape(B, S, D)

    # TODO(synk): `x is x2` cannot fire under jit (distinct tracers); results
    # stay correct but the half-traffic single-tensor path is then skipped.
    if x is x2:
        (o,) = rotary_apply_pallas((to_rows(x),), cos_t, sin_e_t,
                                   row_tile=row_tile, donate_inputs=donate_inputs)
        o = from_rows(o)
        return o, o

    o1, o2 = rotary_apply_pallas((to_rows(x), to_rows(x2)), cos_t, sin_e_t,
                                 row_tile=row_tile, donate_inputs=donate_inputs)
    return from_rows(o1), from_rows(o2)


class RotaryPositionalEmbedding:
    """Stateful equivalent of the PyTorch module: holds the sinusoidal weight
    and caches the packed cos/sin_e tables per (seq_len, pkv, layout, dtype)."""

    def __init__(self, num_positions: int, embedding_dim: int):
        self.num_positions = num_positions
        self.embedding_dim = embedding_dim
        self.weight = jnp.asarray(make_sinusoidal_weight(num_positions, embedding_dim))
        self._table_cache = {}

    def _tables(self, seq_len, past_kv, rs, lanes, dtype):
        key = (seq_len, past_kv, rs, lanes, jnp.dtype(dtype).name)
        if key not in self._table_cache:
            self._table_cache[key] = _build_tables(
                self.weight, seq_len, self.embedding_dim, past_kv, rs, lanes, dtype)
        return self._table_cache[key]

    def __call__(self, x, x2, past_key_values_length: int = 0):
        return rotary_forward(x, x2, self.weight, past_key_values_length,
                              table_fn=self._tables)


# ----------------------------------------------------------------------------
# Pure-numpy reference (mirrors apply_rotary_position_embeddings)
# ----------------------------------------------------------------------------
def _ref_rope(sinusoidal_pos, q):
    sin, cos = np.split(sinusoidal_pos, 2, axis=-1)
    sin_pos = np.repeat(sin, 2, axis=-1)
    cos_pos = np.repeat(cos, 2, axis=-1)
    rot = np.stack([-q[..., 1::2], q[..., ::2]], axis=-1).reshape(q.shape)
    return q * cos_pos + rot * sin_pos


if __name__ == "__main__":
    key = jax.random.PRNGKey(0)

    # --- case 1: lane-dense path (S*D multiple of 128), module-style class ----
    B, S, D = 2, 8, 32
    num_positions = 64
    weight_np = make_sinusoidal_weight(num_positions, D)
    rope = RotaryPositionalEmbedding(num_positions, D)

    k1, k2, key = jax.random.split(key, 3)
    x = jax.random.normal(k1, (B, S, D), dtype=jnp.float32)
    x2 = jax.random.normal(k2, (B, S, D), dtype=jnp.float32)

    o1, o2 = rope(x, x2)
    o1 = jax.block_until_ready(o1)
    o2 = jax.block_until_ready(o2)
    ref1 = _ref_rope(weight_np[None, :S, :], np.asarray(x))
    ref2 = _ref_rope(weight_np[None, :S, :], np.asarray(x2))
    np.testing.assert_allclose(np.asarray(o1), ref1, rtol=1e-5, atol=1e-5)
    np.testing.assert_allclose(np.asarray(o2), ref2, rtol=1e-5, atol=1e-5)

    # aliased path (x is x2): single-tensor kernel, half the HBM traffic
    o3, o4 = rope(x, x)
    o3 = jax.block_until_ready(o3)
    assert o3 is o4
    np.testing.assert_allclose(np.asarray(o3), ref1, rtol=1e-5, atol=1e-5)

    # bf16 inputs -> bf16 tables (half the table HBM bytes), f32 math in-kernel
    xb = x.astype(jnp.bfloat16)
    xb2 = x2.astype(jnp.bfloat16)
    ob1, ob2 = rope(xb, xb2)
    ob1 = jax.block_until_ready(ob1)
    refb1 = _ref_rope(weight_np[None, :S, :], np.asarray(xb, dtype=np.float32))
    refb2 = _ref_rope(weight_np[None, :S, :], np.asarray(xb2, dtype=np.float32))
    np.testing.assert_allclose(np.asarray(ob1, dtype=np.float32), refb1, atol=5e-2)
    np.testing.assert_allclose(np.asarray(ob2, dtype=np.float32), refb2, atol=5e-2)

    # --- case 2: padded path (S*D not a multiple of 128) + pkv offset ---------
    Bf, Sf, Df = 2, 6, 32          # 6*32 = 192 -> padded to 256 lanes
    pkv = 3
    weight_f_np = make_sinusoidal_weight(num_positions, Df)
    weight_f = jnp.asarray(weight_f_np)
    k3, k4, key = jax.random.split(key, 3)
    xf = jax.random.normal(k3, (Bf, Sf, Df), dtype=jnp.float32)
    xf2 = jax.random.normal(k4, (Bf, Sf, Df), dtype=jnp.float32)

    of1, of2 = rotary_forward(xf, xf2, weight_f, past_key_values_length=pkv)
    of1 = jax.block_until_ready(of1)
    of2 = jax.block_until_ready(of2)
    reff1 = _ref_rope(weight_f_np[None, pkv:pkv + Sf, :], np.asarray(xf))
    reff2 = _ref_rope(weight_f_np[None, pkv:pkv + Sf, :], np.asarray(xf2))
    np.testing.assert_allclose(np.asarray(of1), reff1, rtol=1e-5, atol=1e-5)
    np.testing.assert_allclose(np.asarray(of2), reff2, rtol=1e-5, atol=1e-5)

    # --- case 3: multi-tile grid (forced small row_tile) to exercise the
    #             table-resident (row_tiles, B) pipeline ------------------------
    Bm, Sm, Dm = 2, 32, 128        # flat = 4096 -> 32 rows; target 8 -> 4 tiles
    weight_m_np = make_sinusoidal_weight(num_positions, Dm)
    weight_m = jnp.asarray(weight_m_np)
    k5, k6, key = jax.random.split(key, 3)
    xm = jax.random.normal(k5, (Bm, Sm, Dm), dtype=jnp.float32)
    xm2 = jax.random.normal(k6, (Bm, Sm, Dm), dtype=jnp.float32)
    om1, om2 = rotary_forward(xm, xm2, weight_m, past_key_values_length=5,
                              row_tile_target=8)
    om1 = jax.block_until_ready(om1)
    om2 = jax.block_until_ready(om2)
    refm1 = _ref_rope(weight_m_np[None, 5:5 + Sm, :], np.asarray(xm))
    refm2 = _ref_rope(weight_m_np[None, 5:5 + Sm, :], np.asarray(xm2))
    np.testing.assert_allclose(np.asarray(om1), refm1, rtol=1e-5, atol=1e-5)
    np.testing.assert_allclose(np.asarray(om2), refm2, rtol=1e-5, atol=1e-5)

    print("KERNEL_OK")
</pallas_src>

<mosaic_0001>
module attributes {stable_mosaic.version = 11 : i64} {
  func.func @_rope_kernel_pair(%arg0: i32, %arg1: i32, %arg2: memref<1x2x128xf32, #tpu.memory_space<vmem>>, %arg3: memref<1x2x128xf32, #tpu.memory_space<vmem>>, %arg4: memref<2x128xf32, #tpu.memory_space<vmem>>, %arg5: memref<2x128xf32, #tpu.memory_space<vmem>>, %arg6: memref<1x2x128xf32, #tpu.memory_space<vmem>>, %arg7: memref<1x2x128xf32, #tpu.memory_space<vmem>>) attributes {dimension_semantics = [#tpu.dimension_semantics<parallel>, #tpu.dimension_semantics<parallel>], iteration_bounds = array<i64: 1, 2>, scalar_prefetch = 0 : i64, scratch_operands = 0 : i64, tpu.core_type = #tpu.core_type<tc>, window_params = [{transform_indices = @transform_0, window_bounds = array<i64: 1, 2, 128>}, {transform_indices = @transform_1, window_bounds = array<i64: 1, 2, 128>}, {transform_indices = @transform_2, window_bounds = array<i64: 2, 128>}, {transform_indices = @transform_3, window_bounds = array<i64: 2, 128>}, {transform_indices = @transform_4, window_bounds = array<i64: 1, 2, 128>}, {transform_indices = @transform_5, window_bounds = array<i64: 1, 2, 128>}]} {
    %c0 = arith.constant 0 : index
    %c0_0 = arith.constant 0 : index
    %0 = vector.load %arg4[%c0, %c0_0] : memref<2x128xf32, #tpu.memory_space<vmem>>, vector<2x128xf32>
    %c0_1 = arith.constant 0 : index
    %c0_2 = arith.constant 0 : index
    %1 = vector.load %arg5[%c0_1, %c0_2] : memref<2x128xf32, #tpu.memory_space<vmem>>, vector<2x128xf32>
    %c1_i32 = arith.constant 1 : i32
    %2 = tpu.dynamic_rotate %1 by %c1_i32 dim 1 : vector<2x128xf32>, i32 -> vector<2x128xf32>
    %c0_3 = arith.constant 0 : index
    %c0_4 = arith.constant 0 : index
    %c0_5 = arith.constant 0 : index
    %3 = vector.load %arg2[%c0_3, %c0_4, %c0_5] : memref<1x2x128xf32, #tpu.memory_space<vmem>>, vector<1x2x128xf32>
    %4 = vector.shape_cast %3 : vector<1x2x128xf32> to vector<2x128xf32>
    %c1_i32_6 = arith.constant 1 : i32
    %5 = tpu.dynamic_rotate %4 by %c1_i32_6 dim 1 : vector<2x128xf32>, i32 -> vector<2x128xf32>
    %c127_i32 = arith.constant 127 : i32
    %6 = tpu.dynamic_rotate %4 by %c127_i32 dim 1 : vector<2x128xf32>, i32 -> vector<2x128xf32>
    %7 = arith.mulf %4, %0 : vector<2x128xf32>
    %8 = arith.mulf %5, %2 : vector<2x128xf32>
    %9 = arith.addf %7, %8 : vector<2x128xf32>
    %10 = arith.mulf %6, %1 : vector<2x128xf32>
    %11 = arith.subf %9, %10 : vector<2x128xf32>
    %c0_7 = arith.constant 0 : index
    %c0_8 = arith.constant 0 : index
    %c0_9 = arith.constant 0 : index
    %12 = vector.load %arg6[%c0_7, %c0_8, %c0_9] : memref<1x2x128xf32, #tpu.memory_space<vmem>>, vector<1x2x128xf32>
    %13 = vector.shape_cast %12 : vector<1x2x128xf32> to vector<2x128xf32>
    %14 = vector.shape_cast %11 : vector<2x128xf32> to vector<1x2x128xf32>
    tpu.vector_store %arg6[%c0_7, %c0_8, %c0_9], %14 {strides = array<i32>} : memref<1x2x128xf32, #tpu.memory_space<vmem>>, vector<1x2x128xf32>,
    %c0_10 = arith.constant 0 : index
    %c0_11 = arith.constant 0 : index
    %c0_12 = arith.constant 0 : index
    %15 = vector.load %arg3[%c0_10, %c0_11, %c0_12] : memref<1x2x128xf32, #tpu.memory_space<vmem>>, vector<1x2x128xf32>
    %16 = vector.shape_cast %15 : vector<1x2x128xf32> to vector<2x128xf32>
    %c1_i32_13 = arith.constant 1 : i32
    %17 = tpu.dynamic_rotate %16 by %c1_i32_13 dim 1 : vector<2x128xf32>, i32 -> vector<2x128xf32>
    %c127_i32_14 = arith.constant 127 : i32
    %18 = tpu.dynamic_rotate %16 by %c127_i32_14 dim 1 : vector<2x128xf32>, i32 -> vector<2x128xf32>
    %19 = arith.mulf %16, %0 : vector<2x128xf32>
    %20 = arith.mulf %17, %2 : vector<2x128xf32>
    %21 = arith.addf %19, %20 : vector<2x128xf32>
    %22 = arith.mulf %18, %1 : vector<2x128xf32>
    %23 = arith.subf %21, %22 : vector<2x128xf32>
    %c0_15 = arith.constant 0 : index
    %c0_16 = arith.constant 0 : index
    %c0_17 = arith.constant 0 : index
    %24 = vector.load %arg7[%c0_15, %c0_16, %c0_17] : memref<1x2x128xf32, #tpu.memory_space<vmem>>, vector<1x2x128xf32>
    %25 = vector.shape_cast %24 : vector<1x2x128xf32> to vector<2x128xf32>
    %26 = vector.shape_cast %23 : vector<2x128xf32> to vector<1x2x128xf32>
    tpu.vector_store %arg7[%c0_15, %c0_16, %c0_17], %26 {strides = array<i32>} : memref<1x2x128xf32, #tpu.memory_space<vmem>>, vector<1x2x128xf32>,
    return
  }
  func.func @transform_0(%arg0: i32, %arg1: i32) -> (i32, i32, i32) {
    %c0_i32 = arith.constant 0 : i32
    %c0_i32_0 = arith.constant 0 : i32
    return %arg1, %arg0, %c0_i32 : i32, i32, i32
  }
  func.func @transform_1(%arg0: i32, %arg1: i32) -> (i32, i32, i32) {
    %c0_i32 = arith.constant 0 : i32
    %c0_i32_0 = arith.constant 0 : i32
    return %arg1, %arg0, %c0_i32 : i32, i32, i32
  }
  func.func @transform_2(%arg0: i32, %arg1: i32) -> (i32, i32) {
    %c0_i32 = arith.constant 0 : i32
    %c0_i32_0 = arith.constant 0 : i32
    return %arg0, %c0_i32 : i32, i32
  }
  func.func @transform_3(%arg0: i32, %arg1: i32) -> (i32, i32) {
    %c0_i32 = arith.constant 0 : i32
    %c0_i32_0 = arith.constant 0 : i32
    return %arg0, %c0_i32 : i32, i32
  }
  func.func @transform_4(%arg0: i32, %arg1: i32) -> (i32, i32, i32) {
    %c0_i32 = arith.constant 0 : i32
    %c0_i32_0 = arith.constant 0 : i32
    return %arg1, %arg0, %c0_i32 : i32, i32, i32
  }
  func.func @transform_5(%arg0: i32, %arg1: i32) -> (i32, i32, i32) {
    %c0_i32 = arith.constant 0 : i32
    %c0_i32_0 = arith.constant 0 : i32
    return %arg1, %arg0, %c0_i32 : i32, i32, i32
  }
}

</mosaic_0001>

<llo_original>
// kernel: tpu_custom_call.1
$region0: #{tpu_custom_call.1}
  #allocation0 [shape = 'u32[]', space=smem, size = 0x4, offset = 0x4, fixed_abs, tag = 'smem constant byte address 0x4 - core index']
  #allocation1 [shape = 'u32[144,128]{1,0:T(1,128)}', space=vmem, size = 0x12000, scoped, tag = 'internal scratch']
  %s0 = inlined_call_operand.hbm [shape: f32[2,2,128], index: 0, kind: input, shape index: {}]
  %s1 = inlined_call_operand.hbm [shape: f32[2,2,128], index: 1, kind: input, shape index: {}]
  %s2 = inlined_call_operand.vmem [shape: f32[2,128], index: 2, kind: input, shape index: {}]
  %s3 = inlined_call_operand.vmem [shape: f32[2,128], index: 3, kind: input, shape index: {}]
  %s4 = inlined_call_operand.hbm [shape: f32[2,2,128], index: 4, kind: output, shape index: {0}]
  %s5 = inlined_call_operand.hbm [shape: f32[2,2,128], index: 5, kind: output, shape index: {1}]
  %6 = xla_tuple %s4, %s5
  %s7 = sld [smem:[#allocation0]]
  $region65: #{tpu_custom_call.1} parent=0
    _
  %s9 = ssub.s32 1, %s7
  %s10 = scalar_select 0, %s9, %s7
  $region1: #{tpu_custom_call.1} parent=0
    #allocation2 [shape = 'u8[2048]{0}', space=vmem, size = 0x800, scoped, tag = 'input window, operand 0']
    #allocation3 [shape = 's32[2]{0}', space=sflag, size = 0x8, scoped, tag = 'scoped memory for tpu_custom_call.1']
    #allocation4 [shape = 's32[2]{0}', space=sflag, size = 0x8, scoped, tag = 'scoped memory for tpu_custom_call.1']
    #allocation5 [shape = 'u8[2048]{0}', space=vmem, size = 0x800, scoped, tag = 'input window, operand 1']
    #allocation6 [shape = 's32[2]{0}', space=sflag, size = 0x8, scoped, tag = 'scoped memory for tpu_custom_call.1']
    #allocation7 [shape = 'u8[2048]{0}', space=vmem, size = 0x800, scoped, tag = 'output window, operand 0']
    #allocation8 [shape = 'u8[2048]{0}', space=vmem, size = 0x800, scoped, tag = 'output window, operand 1']
    #allocation9 [shape = 's32[2]{0}', space=sflag, size = 0x8, scoped, tag = 'scoped memory for tpu_custom_call.1']
    %11 = vsyncpa [#allocation3], 0
    %s12 = scalar_lea.sflag [#allocation3], 1
    %13 = vsyncpa %s12, 0
    %14 = vsyncpa [#allocation6], 0
    %s15 = scalar_lea.sflag [#allocation6], 1
    %16 = vsyncpa %s15, 0
    %17 = vsyncpa [#allocation4], 0
    %s18 = scalar_lea.sflag [#allocation4], 1
    %19 = vsyncpa %s18, 0
    %20 = vsyncpa [#allocation9], 0
    %s21 = scalar_lea.sflag [#allocation9], 1
    %22 = vsyncpa %s21, 0
    loop: start=0, step=1, limit=4
    $region2: #{tpu_custom_call.1} parent=1 // loop_pre_header
      _
    $region3: #{tpu_custom_call.1} parent=1 // loop_header
      %s24 = sphi 0, %s28
      %p25 = scmp.ge.s32.totalorder %s24, 4
      %s31 = sphi 0, %s43
      %s32 = sphi 0, %s39
      %s33 = sphi 0, %s31
      %s34 = sphi 0, %s32
      %s35 = sphi 0, %s33
      %s36 = sphi 0, %s34
      %s48 = sphi 0, %s50
      %s51 = sphi 0, %s48
      %s52 = sphi 0, %s51
      %s68 = sphi 0, %s52
      %s76 = sphi 0, %s78
      %s79 = sphi 0, %s76
      %s80 = sphi 0, %s79
      %s96 = sphi 0, %s80
      %s102 = sphi 0, %s104
      %s105 = sphi 0, %s102
      %s106 = sphi 0, %s105
      %s122 = sphi 0, %s106
      %s128 = sphi 0, %s130
      %s131 = sphi 0, %s128
      %s132 = sphi 0, %s131
      %s148 = sphi 0, %s132
      %s156 = sphi 0, %s158
      %s159 = sphi 0, %s156
      %s160 = sphi 0, %s159
      %s176 = sphi 0, %s160
      %s184 = sphi 0, %s186
      %s187 = sphi 0, %s184
      %s188 = sphi 0, %s187
      %s204 = sphi 0, %s188
    $region4: #{tpu_custom_call.1} parent=1 // loop_header_branch
      %27 = sbr.rel (%p25) target = $region8
    $region5: #{tpu_custom_call.1} parent=1 // loop_body
      %s29 = ssub.s32 %s24, 1
      %s30 = ssub.s32 %s24, 2
      %s37 = sadd.s32 1, %s32
      %p38 = scmp.ge.s32.totalorder %s37, 2
      %s39 = scalar_select %p38, 0, %s37
      %s40 = sadd.s32 1, %s31
      %s41 = scalar_select %p38, %s40, %s31
      %p42 = scmp.ge.s32.totalorder %s41, 1
      %s43 = scalar_select %p42, 0, %s41
      %s44 = ssub.s32 %s32, %s39
      %s45 = ssub.s32 %s31, %s43
      %s46 = sor.u32 %s44, %s45
      %p47 = scmp.eq.s32.totalorder %s46, 0
      %s49 = sadd.s32 %s48, 1
      %s50 = scalar_select %p47, %s48, %s49
      %p53 = pneg %p47
      %p54 = scmp.eq.s32.totalorder %s24, 1
      %p55 = por %p53, %p54
      %p56 = scmp.ne.s32.totalorder %s48, %s51
      %p57 = scmp.eq.s32.totalorder %s24, 0
      %p58 = por %p56, %p57
      %p59 = scmp.ne.s32.totalorder %s48, %s51
      %p60 = scmp.eq.s32.totalorder %s29, 1
      %p61 = por %p59, %p60
      %p62 = scmp.ne.s32.totalorder %s51, %s52
      %p63 = scmp.eq.s32.totalorder %s29, 0
      %p64 = por %p62, %p63
      %p65 = scmp.ne.s32.totalorder %s51, %s52
      %p66 = scmp.eq.s32.totalorder %s30, 1
      %p67 = por %p65, %p66
      %p69 = scmp.ne.s32.totalorder %s52, %s68
      %p70 = scmp.eq.s32.totalorder %s30, 0
      %p71 = por %p69, %p70
      %s72 = ssub.s32 %s32, %s39
      %s73 = ssub.s32 %s31, %s43
      %s74 = sor.u32 %s72, %s73
      %p75 = scmp.eq.s32.totalorder %s74, 0
      %s77 = sadd.s32 %s76, 1
      %s78 = scalar_select %p75, %s76, %s77
      %p81 = pneg %p75
      %p82 = scmp.eq.s32.totalorder %s24, 1
      %p83 = por %p81, %p82
      %p84 = scmp.ne.s32.totalorder %s76, %s79
      %p85 = scmp.eq.s32.totalorder %s24, 0
      %p86 = por %p84, %p85
      %p87 = scmp.ne.s32.totalorder %s76, %s79
      %p88 = scmp.eq.s32.totalorder %s29, 1
      %p89 = por %p87, %p88
      %p90 = scmp.ne.s32.totalorder %s79, %s80
      %p91 = scmp.eq.s32.totalorder %s29, 0
      %p92 = por %p90, %p91
      %p93 = scmp.ne.s32.totalorder %s79, %s80
      %p94 = scmp.eq.s32.totalorder %s30, 1
      %p95 = por %p93, %p94
      %p97 = scmp.ne.s32.totalorder %s80, %s96
      %p98 = scmp.eq.s32.totalorder %s30, 0
      %p99 = por %p97, %p98
      %s100 = ssub.s32 %s31, %s43
      %p101 = scmp.eq.s32.totalorder %s100, 0
      %s103 = sadd.s32 %s102, 1
      %s104 = scalar_select %p101, %s102, %s103
      %p107 = pneg %p101
      %p108 = scmp.eq.s32.totalorder %s24, 1
      %p109 = por %p107, %p108
      %p110 = scmp.ne.s32.totalorder %s102, %s105
      %p111 = scmp.eq.s32.totalorder %s24, 0
      %p112 = por %p110, %p111
      %p113 = scmp.ne.s32.totalorder %s102, %s105
      %p114 = scmp.eq.s32.totalorder %s29, 1
      %p115 = por %p113, %p114
      %p116 = scmp.ne.s32.totalorder %s105, %s106
      %p117 = scmp.eq.s32.totalorder %s29, 0
      %p118 = por %p116, %p117
      %p119 = scmp.ne.s32.totalorder %s105, %s106
      %p120 = scmp.eq.s32.totalorder %s30, 1
      %p121 = por %p119, %p120
      %p123 = scmp.ne.s32.totalorder %s106, %s122
      %p124 = scmp.eq.s32.totalorder %s30, 0
      %p125 = por %p123, %p124
      %s126 = ssub.s32 %s31, %s43
      %p127 = scmp.eq.s32.totalorder %s126, 0
      %s129 = sadd.s32 %s128, 1
      %s130 = scalar_select %p127, %s128, %s129
      %p133 = pneg %p127
      %p134 = scmp.eq.s32.totalorder %s24, 1
      %p135 = por %p133, %p134
      %p136 = scmp.ne.s32.totalorder %s128, %s131
      %p137 = scmp.eq.s32.totalorder %s24, 0
      %p138 = por %p136, %p137
      %p139 = scmp.ne.s32.totalorder %s128, %s131
      %p140 = scmp.eq.s32.totalorder %s29, 1
      %p141 = por %p139, %p140
      %p142 = scmp.ne.s32.totalorder %s131, %s132
      %p143 = scmp.eq.s32.totalorder %s29, 0
      %p144 = por %p142, %p143
      %p145 = scmp.ne.s32.totalorder %s131, %s132
      %p146 = scmp.eq.s32.totalorder %s30, 1
      %p147 = por %p145, %p146
      %p149 = scmp.ne.s32.totalorder %s132, %s148
      %p150 = scmp.eq.s32.totalorder %s30, 0
      %p151 = por %p149, %p150
      %s152 = ssub.s32 %s32, %s39
      %s153 = ssub.s32 %s31, %s43
      %s154 = sor.u32 %s152, %s153
      %p155 = scmp.eq.s32.totalorder %s154, 0
      %s157 = sadd.s32 %s156, 1
      %s158 = scalar_select %p155, %s156, %s157
      %p161 = pneg %p155
      %p162 = scmp.eq.s32.totalorder %s24, 1
      %p163 = por %p161, %p162
      %p164 = scmp.ne.s32.totalorder %s156, %s159
      %p165 = scmp.eq.s32.totalorder %s24, 0
      %p166 = por %p164, %p165
      %p167 = scmp.ne.s32.totalorder %s156, %s159
      %p168 = scmp.eq.s32.totalorder %s29, 1
      %p169 = por %p167, %p168
      %p170 = scmp.ne.s32.totalorder %s159, %s160
      %p171 = scmp.eq.s32.totalorder %s29, 0
      %p172 = por %p170, %p171
      %p173 = scmp.ne.s32.totalorder %s159, %s160
      %p174 = scmp.eq.s32.totalorder %s30, 1
      %p175 = por %p173, %p174
      %p177 = scmp.ne.s32.totalorder %s160, %s176
      %p178 = scmp.eq.s32.totalorder %s30, 0
      %p179 = por %p177, %p178
      %s180 = ssub.s32 %s32, %s39
      %s181 = ssub.s32 %s31, %s43
      %s182 = sor.u32 %s180, %s181
      %p183 = scmp.eq.s32.totalorder %s182, 0
      %s185 = sadd.s32 %s184, 1
      %s186 = scalar_select %p183, %s184, %s185
      %p189 = pneg %p183
      %p190 = scmp.eq.s32.totalorder %s24, 1
      %p191 = por %p189, %p190
      %p192 = scmp.ne.s32.totalorder %s184, %s187
      %p193 = scmp.eq.s32.totalorder %s24, 0
      %p194 = por %p192, %p193
      %p195 = scmp.ne.s32.totalorder %s184, %s187
      %p196 = scmp.eq.s32.totalorder %s29, 1
      %p197 = por %p195, %p196
      %p198 = scmp.ne.s32.totalorder %s187, %s188
      %p199 = scmp.eq.s32.totalorder %s29, 0
      %p200 = por %p198, %p199
      %p201 = scmp.ne.s32.totalorder %s187, %s188
      %p202 = scmp.eq.s32.totalorder %s30, 1
      %p203 = por %p201, %p202
      %p205 = scmp.ne.s32.totalorder %s188, %s204
      %p206 = scmp.eq.s32.totalorder %s30, 0
      %p207 = por %p205, %p206
      %p208 = scmp.le.s32.totalorder 1, %s24
      %p209 = scmp.lt.s32.totalorder %s24, 3
      %p210 = pnand %p208, %p209
      %p211 = pneg %p210
      // Predicated region
      $region9: #{tpu_custom_call.1} parent=5 // pred_check
        _
      $region10: #{tpu_custom_call.1} parent=5 // pred_check_branch
        %213 = sbr.rel (%p210) target = $region12
      $region11: #{tpu_custom_call.1} parent=5 // pred_region
        %s214 = ssub.s32 %s24, 1
        // Predicated region
        $region13: #{tpu_custom_call.1} parent=11 // pred_check
          %p215 = pneg %p118
        $region14: #{tpu_custom_call.1} parent=11 // pred_check_branch
          %217 = sbr.rel (%p215) target = $region16
        $region15: #{tpu_custom_call.1} parent=11 // pred_region
          %p218 = scmp.lt.s32.totalorder %s33, 0
          %s219 = scalar_select %p218, %s33, 0
          %s220 = smul.addr %s219, 2
          %s221 = scalar_lea.vmem %s2, %s220
        $region16: #{tpu_custom_call.1} parent=11 // pred_fallthru
          _
        // Predicated region
        $region17: #{tpu_custom_call.1} parent=11 // pred_check
          %p222 = pneg %p144
        $region18: #{tpu_custom_call.1} parent=11 // pred_check_branch
          %224 = sbr.rel (%p222) target = $region20
        $region19: #{tpu_custom_call.1} parent=11 // pred_region
          %p225 = scmp.lt.s32.totalorder %s33, 0
          %s226 = scalar_select %p225, %s33, 0
          %s227 = smul.addr %s226, 2
          %s228 = scalar_lea.vmem %s3, %s227
        $region20: #{tpu_custom_call.1} parent=11 // pred_fallthru
          _
      $region12: #{tpu_custom_call.1} parent=5 // pred_fallthru
        _
      %p229 = scmp.lt.s32.totalorder %s24, 2
      // Predicated region
      $region21: #{tpu_custom_call.1} parent=5 // pred_check
        %p230 = pneg %p229
      $region22: #{tpu_custom_call.1} parent=5 // pred_check_branch
        %232 = sbr.rel (%p230) target = $region24
      $region23: #{tpu_custom_call.1} parent=5 // pred_region
        // Predicated region
        $region25: #{tpu_custom_call.1} parent=23 // pred_check
          %p233 = pneg %p58
        $region26: #{tpu_custom_call.1} parent=23 // pred_check_branch
          %235 = sbr.rel (%p233) target = $region28
        $region27: #{tpu_custom_call.1} parent=23 // pred_region
          %s236 = sand.u32 %s48, 1
          %s237 = scalar_lea.sflag [#allocation3], %s236
          %s238 = sand.u32 %s48, 1
          %s239 = smul.addr %s238, 2
          %s240 = scalar_lea.vmem [#allocation2], %s239
          %s242 = ssub.s32 32, 32
          %243 = vsyncadd %s237, %s242
          %s244 = sadd.s32 %s31, %s32
          %s245 = smul.addr %s244, 32
          %s246 = scalar_lea.hbm %s0, %s245
          %s248 = sshll.u32 %s240, 4
          %s249 = int_to_ptr.vmem [resolvable:$true] %s248
          %251 = dma.hbm_to_vmem [thread:$0]  %s246, 32, %s249, %s237
        $region28: #{tpu_custom_call.1} parent=23 // pred_fallthru
          _
        // Predicated region
        $region29: #{tpu_custom_call.1} parent=23 // pred_check
          %p252 = pneg %p86
        $region30: #{tpu_custom_call.1} parent=23 // pred_check_branch
          %254 = sbr.rel (%p252) target = $region32
        $region31: #{tpu_custom_call.1} parent=23 // pred_region
          %s255 = sand.u32 %s76, 1
          %s256 = scalar_lea.sflag [#allocation6], %s255
          %s257 = sand.u32 %s76, 1
          %s258 = smul.addr %s257, 2
          %s259 = scalar_lea.vmem [#allocation5], %s258
          %s261 = ssub.s32 32, 32
          %262 = vsyncadd %s256, %s261
          %s263 = sadd.s32 %s31, %s32
          %s264 = smul.addr %s263, 32
          %s265 = scalar_lea.hbm %s1, %s264
          %s267 = sshll.u32 %s259, 4
          %s268 = int_to_ptr.vmem [resolvable:$true] %s267
          %270 = dma.hbm_to_vmem [thread:$0]  %s265, 32, %s268, %s256
        $region32: #{tpu_custom_call.1} parent=23 // pred_fallthru
          _
      $region24: #{tpu_custom_call.1} parent=5 // pred_fallthru
        _
      %p271 = scmp.le.s32.totalorder 1, %s24
      %p272 = scmp.lt.s32.totalorder %s24, 3
      %p273 = pnand %p271, %p272
      %p274 = pneg %p273
      // Predicated region
      $region33: #{tpu_custom_call.1} parent=5 // pred_check
        _
      $region34: #{tpu_custom_call.1} parent=5 // pred_check_branch
        %276 = sbr.rel (%p273) target = $region36
      $region35: #{tpu_custom_call.1} parent=5 // pred_region
        %s277 = ssub.s32 %s24, 1
        %s278 = sand.u32 %s51, 1
        %s279 = scalar_lea.sflag [#allocation3], %s278
        %s280 = sand.u32 %s51, 1
        %s281 = smul.addr %s280, 2
        %s282 = scalar_lea.vmem [#allocation2], %s281
        // Predicated region
        $region37: #{tpu_custom_call.1} parent=35 // pred_check
          %p283 = pneg %p64
        $region38: #{tpu_custom_call.1} parent=35 // pred_check_branch
          %285 = sbr.rel (%p283) target = $region40
        $region39: #{tpu_custom_call.1} parent=35 // pred_region
          %286 = dma.done %s279, 32
        $region40: #{tpu_custom_call.1} parent=35 // pred_fallthru
          _
        %s287 = sand.u32 %s79, 1
        %s288 = scalar_lea.sflag [#allocation6], %s287
        %s289 = sand.u32 %s79, 1
        %s290 = smul.addr %s289, 2
        %s291 = scalar_lea.vmem [#allocation5], %s290
        // Predicated region
        $region41: #{tpu_custom_call.1} parent=35 // pred_check
          %p292 = pneg %p92
        $region42: #{tpu_custom_call.1} parent=35 // pred_check_branch
          %294 = sbr.rel (%p292) target = $region44
        $region43: #{tpu_custom_call.1} parent=35 // pred_region
          %295 = dma.done %s288, 32
        $region44: #{tpu_custom_call.1} parent=35 // pred_fallthru
          _
        %s296 = sand.u32 %s51, 1
        %s297 = scalar_lea.sflag [#allocation3], %s296
        %s298 = sand.u32 %s51, 1
        %s299 = smul.addr %s298, 2
        %s300 = scalar_lea.vmem [#allocation2], %s299
        %p301 = pneg %p64
        %p302 = pneg %p61
        %s303 = sand.u32 %s79, 1
        %s304 = scalar_lea.sflag [#allocation6], %s303
        %s305 = sand.u32 %s79, 1
        %s306 = smul.addr %s305, 2
        %s307 = scalar_lea.vmem [#allocation5], %s306
        %p308 = pneg %p92
        %p309 = pneg %p89
        %p310 = scmp.lt.s32.totalorder %s33, 0
        %s311 = scalar_select %p310, %s33, 0
        %s312 = smul.addr %s311, 2
        %s313 = scalar_lea.vmem %s2, %s312
        %p314 = pneg %p118
        %p315 = pneg %p115
        %p316 = scmp.lt.s32.totalorder %s33, 0
        %s317 = scalar_select %p316, %s33, 0
        %s318 = smul.addr %s317, 2
        %s319 = scalar_lea.vmem %s3, %s318
        %p320 = pneg %p144
        %p321 = pneg %p141
        %p322 = pneg %p172
        %p323 = pneg %p169
        %s324 = sand.u32 %s159, 1
        %s325 = scalar_lea.sflag [#allocation4], %s324
        %s326 = sand.u32 %s159, 1
        %s327 = smul.addr %s326, 2
        %s328 = scalar_lea.vmem [#allocation7], %s327
        %p329 = pneg %p200
        %p330 = pneg %p197
        %s331 = sand.u32 %s187, 1
        %s332 = scalar_lea.sflag [#allocation9], %s331
        %s333 = sand.u32 %s187, 1
        %s334 = smul.addr %s333, 2
        %s335 = scalar_lea.vmem [#allocation8], %s334
        %p336 = scmp.lt.s32.totalorder %s33, 0
        %s337 = scalar_select %p336, %s33, 0
        %s338 = smul.addr %s337, 2
        %s339 = scalar_lea.vmem %s2, %s338
        %p340 = scmp.lt.s32.totalorder %s33, 0
        %s341 = scalar_select %p340, %s33, 0
        %s342 = smul.addr %s341, 2
        %s343 = scalar_lea.vmem %s3, %s342
        %v344 = vld [vmem:[%s339] sm:$0x3]
        %v345 = vld [vmem:[%s343] sm:$0x3]
        %346 = vrot.lane.b32.xlu0 %v345, 1
        %v347 = vpop.permute.xlu0 %346
        %v348 = vld [vmem:[%s282] sm:$0x3]
        %349 = vrot.lane.b32.xlu0 %v348, 1
        %v350 = vpop.permute.xlu0 %349
        %351 = vrot.lane.b32.xlu0 %v348, 127
        %v352 = vpop.permute.xlu0 %351
        %v353 = vmul.f32 %v348, %v344
        %v354 = vmul.f32 %v350, %v347
        %v355 = vadd.f32 %v353, %v354
        %v356 = vmul.f32 %v352, %v345
        %v357 = vsub.f32 %v355, %v356
        %358 = vst [vmem:[%s328] sm:$0x3] %v357
        %v359 = vld [vmem:[%s291] sm:$0x3]
        %360 = vrot.lane.b32.xlu0 %v359, 1
        %v361 = vpop.permute.xlu0 %360
        %362 = vrot.lane.b32.xlu0 %v359, 127
        %v363 = vpop.permute.xlu0 %362
        %v364 = vmul.f32 %v359, %v344
        %v365 = vmul.f32 %v361, %v347
        %v366 = vadd.f32 %v364, %v365
        %v367 = vmul.f32 %v363, %v345
        %v368 = vsub.f32 %v366, %v367
        %369 = vst [vmem:[%s335] sm:$0x3] %v368
        %s370 = sand.u32 %s159, 1
        %s371 = scalar_lea.sflag [#allocation4], %s370
        %s372 = sand.u32 %s159, 1
        %s373 = smul.addr %s372, 2
        %s374 = scalar_lea.vmem [#allocation7], %s373
        %s375 = sand.u32 %s187, 1
        %s376 = scalar_lea.sflag [#allocation9], %s375
        %s377 = sand.u32 %s187, 1
        %s378 = smul.addr %s377, 2
        %s379 = scalar_lea.vmem [#allocation8], %s378
        // Predicated region
        $region45: #{tpu_custom_call.1} parent=35 // pred_check
          %p380 = pneg %p169
        $region46: #{tpu_custom_call.1} parent=35 // pred_check_branch
          %382 = sbr.rel (%p380) target = $region48
        $region47: #{tpu_custom_call.1} parent=35 // pred_region
          %s384 = ssub.s32 32, 32
          %385 = vsyncadd %s371, %s384
          %s386 = sadd.s32 %s33, %s34
          %s387 = smul.addr %s386, 32
          %s388 = scalar_lea.hbm %s4, %s387
          %s390 = sshll.u32 %s374, 4
          %s391 = int_to_ptr.vmem [resolvable:$true] %s390
          %393 = dma.vmem_to_hbm [thread:$0]  %s391, 32, %s388, %s371
        $region48: #{tpu_custom_call.1} parent=35 // pred_fallthru
          _
        // Predicated region
        $region49: #{tpu_custom_call.1} parent=35 // pred_check
          %p394 = pneg %p197
        $region50: #{tpu_custom_call.1} parent=35 // pred_check_branch
          %396 = sbr.rel (%p394) target = $region52
        $region51: #{tpu_custom_call.1} parent=35 // pred_region
          %s398 = ssub.s32 32, 32
          %399 = vsyncadd %s376, %s398
          %s400 = sadd.s32 %s33, %s34
          %s401 = smul.addr %s400, 32
          %s402 = scalar_lea.hbm %s5, %s401
          %s404 = sshll.u32 %s379, 4
          %s405 = int_to_ptr.vmem [resolvable:$true] %s404
          %407 = dma.vmem_to_hbm [thread:$0]  %s405, 32, %s402, %s376
        $region52: #{tpu_custom_call.1} parent=35 // pred_fallthru
          _
      $region36: #{tpu_custom_call.1} parent=5 // pred_fallthru
        _
      %p408 = scmp.le.s32.totalorder 2, %s24
      // Predicated region
      $region53: #{tpu_custom_call.1} parent=5 // pred_check
        %p409 = pneg %p408
      $region54: #{tpu_custom_call.1} parent=5 // pred_check_branch
        %411 = sbr.rel (%p409) target = $region56
      $region55: #{tpu_custom_call.1} parent=5 // pred_region
        %s412 = ssub.s32 %s24, 2
        // Predicated region
        $region57: #{tpu_custom_call.1} parent=55 // pred_check
          %p413 = pneg %p175
        $region58: #{tpu_custom_call.1} parent=55 // pred_check_branch
          %415 = sbr.rel (%p413) target = $region60
        $region59: #{tpu_custom_call.1} parent=55 // pred_region
          %s416 = sand.u32 %s160, 1
          %s417 = scalar_lea.sflag [#allocation4], %s416
          %s418 = sand.u32 %s160, 1
          %s419 = smul.addr %s418, 2
          %s420 = scalar_lea.vmem [#allocation7], %s419
          %421 = dma.done %s417, 32
        $region60: #{tpu_custom_call.1} parent=55 // pred_fallthru
          _
        // Predicated region
        $region61: #{tpu_custom_call.1} parent=55 // pred_check
          %p422 = pneg %p203
        $region62: #{tpu_custom_call.1} parent=55 // pred_check_branch
          %424 = sbr.rel (%p422) target = $region64
        $region63: #{tpu_custom_call.1} parent=55 // pred_region
          %s425 = sand.u32 %s188, 1
          %s426 = scalar_lea.sflag [#allocation9], %s425
          %s427 = sand.u32 %s188, 1
          %s428 = smul.addr %s427, 2
          %s429 = scalar_lea.vmem [#allocation8], %s428
          %430 = dma.done %s426, 32
        $region64: #{tpu_custom_call.1} parent=55 // pred_fallthru
          _
      $region56: #{tpu_custom_call.1} parent=5 // pred_fallthru
        _
    $region6: #{tpu_custom_call.1} parent=1 // loop_footer
      %s28 = sadd.s32 1, %s24
    $region7: #{tpu_custom_call.1} parent=1 // loop_footer_branch
      %23 = sbr.rel target = $region3
    $region8: #{tpu_custom_call.1} parent=1 // loop_exit
      _
    %431 = vsyncpa [#allocation3], 1
    %s432 = scalar_lea.sflag [#allocation3], 1
    %433 = vsyncpa %s432, 1
    %434 = vsyncpa [#allocation6], 1
    %s435 = scalar_lea.sflag [#allocation6], 1
    %436 = vsyncpa %s435, 1
    %437 = vsyncpa [#allocation4], 1
    %s438 = scalar_lea.sflag [#allocation4], 1
    %439 = vsyncpa %s438, 1
    %440 = vsyncpa [#allocation9], 1
    %s441 = scalar_lea.sflag [#allocation9], 1
    %442 = vsyncpa %s441, 1

</llo_original>
